<compile_context>
chip_gen: v5e
topology: v5e:2x2
jax: 0.10.0
libtpu: 0.0.40
codegen_flags: <defaults>
</compile_context>

<pallas_src>
import functools

import jax
import jax.numpy as jnp
from jax.experimental import pallas as pl
from jax.experimental.pallas import tpu as pltpu


def _ceil_to(x, m):
    return ((x + m - 1) // m) * m


def _lq_ray_shift_kernel(zs_ref, point_ref, w_ref, num_lin_ref, c_term_ref,
                         e_ref, o_ref, *, F, CL, CQ, CLp, CQp,
                         normalize_rays, onto_edge, to_01_mode):
    EPS = 1e-12
    # zs rows are ordered [rays(F)..., length_scale] so slices are tile-aligned.
    zs = zs_ref[...].astype(jnp.float32)                      # (F+1, S)
    rays = zs[0:F, :]                                         # (F, S)

    if normalize_rays:
        nrm2 = jnp.sum(rays * rays, axis=0, keepdims=True)    # (1, S) sublane reduce
        # rays / max(||rays||, EPS) via a single rsqrt multiply.
        r = rays * jax.lax.rsqrt(jnp.maximum(nrm2, EPS * EPS))
    else:
        r = rays

    if not onto_edge:                                         # static flag
        length_scale = zs[F:F + 1, :]                         # (1, S)
        if to_01_mode == "sigmoid":
            betas = jax.nn.sigmoid(length_scale)              # EUP
        else:  # 'relu1'
            betas = jnp.clip(length_scale, 0.0, 1.0)

    # One fused MXU contraction; S is the lane axis, result is lane-dense and
    # every slice below starts on an 8-sublane boundary.
    big = jnp.dot(w_ref[...], r, preferred_element_type=jnp.float32)  # (WR, S)
    Ar = big[0:CL, :]                                 # (CL, S)   = A r
    qr = big[CLp:CLp + CQ, :]                         # (CQ, S)   = q_c . r
    tPr = big[CLp + CQp:CLp + CQp + CQ, :]            # (CQ, S)   = p' P[c] r
    PrT = big[CLp + 2 * CQp:CLp + 2 * CQp + CQ * F, :]  # (CQ*F, S) = all P[c] r

    # ---------------- linear constraints: A x <= b_lin ----------------
    mu_lin = num_lin_ref[...] / Ar                    # (b_lin - A p) / (A r)
    mu_lin = jnp.where(Ar >= 0.0, mu_lin, jnp.inf)
    max_lin = jnp.min(mu_lin, axis=0, keepdims=True)  # (1, S) sublane reduce

    # ------------- quadratic constraints: 0.5 x'Px + q'x <= b ----------
    r_rep = jnp.tile(r, (CQ, 1))                      # (CQ*F, S) sublane replicate
    rPr = jnp.dot(e_ref[...], r_rep * PrT,
                  preferred_element_type=jnp.float32)[0:CQ, :]       # (CQ, S)

    c_term = c_term_ref[...]                          # (CQ, 1)
    tPr_add_qr = tPr + qr
    d4 = jnp.square(tPr_add_qr) - rPr * (2.0 * c_term)
    # ZeroNaNGradientsFn is identity in the forward; sqrt kept unclamped to
    # match the reference semantics exactly.
    alpha_quad = (-tPr_add_qr + jnp.sqrt(d4)) / rPr
    alpha_lin = -c_term / tPr_add_qr
    mu = jnp.where(jnp.abs(rPr) <= EPS, alpha_lin, alpha_quad)
    mu = jnp.where(mu >= 0.0, mu, jnp.inf)
    max_quad = jnp.min(mu, axis=0, keepdims=True)     # (1, S)

    # ---------------------------- combine -----------------------------
    max_len = jnp.minimum(max_lin, max_quad)
    if onto_edge:
        ls = max_len
    else:
        ls = betas * max_len
    o_ref[...] = (point_ref[...] + ls * r).astype(o_ref.dtype)   # (F, S), lane-dense


def prepare_lq_ray_shift_params(A, b_lin, P, q, b_quad, point):
    """One-time preprocessing of the fixed constraint parameters (reuse per call)."""
    A = jnp.asarray(A, jnp.float32)          # (CL, F)
    b_lin = jnp.asarray(b_lin, jnp.float32)  # (CL,)
    P = jnp.asarray(P, jnp.float32)          # (CQ, F, F)
    q = jnp.asarray(q, jnp.float32)          # (CQ, F)
    b_quad = jnp.asarray(b_quad, jnp.float32)
    point = jnp.asarray(point, jnp.float32)  # (F,)
    CL, F = A.shape
    CQ = P.shape[0]
    CLp, CQp = _ceil_to(CL, 8), _ceil_to(CQ, 8)
    CQFp = _ceil_to(CQ * F, 8)

    def pad_rows(x, rows):
        return jnp.pad(x, ((0, rows - x.shape[0]), (0, 0)))

    # p' P[c] as rows; P flattened so row (c*F+g) is P[c, :, g].
    Pp = jnp.einsum('f,cfg->cg', point, P)                        # (CQ, F)
    Pflat = jnp.transpose(P, (0, 2, 1)).reshape(CQ * F, F)        # (CQ*F, F)
    # Segments padded to 8-sublane boundaries -> tile-aligned slices in-kernel.
    W = jnp.concatenate([pad_rows(A, CLp), pad_rows(q, CQp),
                         pad_rows(Pp, CQp), pad_rows(Pflat, CQFp)], axis=0)

    num_lin = (b_lin - A @ point).reshape(CL, 1)                  # b_lin - A p
    tPt = jnp.einsum('f,cfg,g->c', point, P, point)               # p' P[c] p
    c_term = (q @ point + 0.5 * tPt - b_quad).reshape(CQ, 1)
    # Block-diagonal ones (CQp, CQ*F): MXU reduction matrix for r'P[c]r.
    E = pad_rows(jnp.repeat(jnp.eye(CQ, dtype=jnp.float32), F, axis=1), CQp)
    point_col = point.reshape(F, 1)
    meta = dict(F=F, CL=CL, CQ=CQ, CLp=CLp, CQp=CQp)
    return point_col, W, num_lin, c_term, E, meta


def _pick_s_tile(S, max_tile=1024):
    """Lane-axis tile: multiple of 128, >=2 grid steps when S allows (v7x megacore).

    Tiles are small at F~16 (well under the 32 MiB scoped VMEM on every
    generation), so no generation-specific vmem_limit is needed.
    """
    if S <= 128:
        return 128
    if S <= 2 * max_tile:
        return _ceil_to(pl.cdiv(S, 2), 128)
    return max_tile


def lq_ray_shift_forward(zs, params, *, normalize_rays=True, onto_edge=False,
                         to_01_mode="sigmoid", s_tile=None,
                         io_dtype=jnp.float32):
    """JAX/Pallas equivalent of LQRayShiftNN.forward (zs: (S, F+1)) -> (S, F)."""
    point_col, W, num_lin, c_term, E, meta = params
    F, CL, CQ = meta["F"], meta["CL"], meta["CQ"]
    CLp, CQp = meta["CLp"], meta["CQp"]
    zs = jnp.asarray(zs, jnp.float32)
    S = zs.shape[0]
    assert zs.shape[1] == F + 1

    if s_tile is None:
        s_tile = _pick_s_tile(S)
    s_tile = _ceil_to(int(s_tile), 128)
    S_pad = _ceil_to(S, s_tile)          # pad samples instead of asserting divisibility
    grid = (S_pad // s_tile,)
    WR = W.shape[0]

    # Lane-dense layout: samples on the 128-lane axis.  Reorder columns so the
    # kernel sees rows [rays(F)..., length_scale] (tile-aligned slices), then
    # transpose / pad once in XLA.
    zs_T = jnp.transpose(jnp.concatenate([zs[:, 1:], zs[:, 0:1]], axis=1))
    if S_pad != S:
        zs_T = jnp.pad(zs_T, ((0, 0), (0, S_pad - S)))
    zs_T = zs_T.astype(io_dtype)         # bf16 streaming halves HBM traffic

    kernel = functools.partial(
        _lq_ray_shift_kernel, F=F, CL=CL, CQ=CQ, CLp=CLp, CQp=CQp,
        normalize_rays=normalize_rays, onto_edge=onto_edge,
        to_01_mode=to_01_mode)

    const = lambda shape: pl.BlockSpec(shape, lambda i: (0, 0))

    out_T = pl.pallas_call(
        kernel,
        out_shape=jax.ShapeDtypeStruct((F, S_pad), io_dtype),
        grid=grid,
        in_specs=[
            pl.BlockSpec((F + 1, s_tile), lambda i: (0, i)),   # zs^T, tiled on S
            const((F, 1)),                                     # point
            const((WR, F)),                                    # fused weights
            const((CL, 1)),                                    # b_lin - A p
            const((CQ, 1)),                                    # q.p + .5 p'Pp - b
            const((CQp, CQ * F)),                              # block-diag ones
        ],
        out_specs=pl.BlockSpec((F, s_tile), lambda i: (0, i)),
        compiler_params=pltpu.CompilerParams(
            dimension_semantics=("parallel",)),                # v7x: shard S over TCs
    )(zs_T, point_col, W, num_lin, c_term, E)

    return jnp.transpose(out_T[:, :S]).astype(jnp.float32)


def _reference_forward(zs, point, A, b_lin, P, q, b_quad):
    """Pure-JAX mirror of the PyTorch forward (defaults: sigmoid, not onto_edge)."""
    EPS = 1e-12
    length_scale = zs[:, 0]
    rays = zs[:, 1:]
    nrm = jnp.linalg.norm(rays, axis=1, keepdims=True)
    r = rays / jnp.maximum(nrm, EPS)
    p = jnp.tile(point[None, :], (zs.shape[0], 1))
    betas = jax.nn.sigmoid(length_scale)

    numerator = b_lin[None, :] - jnp.einsum('cf,sf->sc', A, p)
    dots = jnp.einsum('cf,sf->sc', A, r)
    mu = numerator / dots
    mu = jnp.where(dots >= 0.0, mu, jnp.inf)
    max_lin = jnp.min(mu, axis=1)

    rPr = jnp.einsum('sf,cfg,sg->sc', r, P, r)
    tPr_qr = jnp.einsum('sf,cfg,sg->sc', p, P, r) + jnp.einsum('cf,sf->sc', q, r)
    tPt = jnp.einsum('sf,cfg,sg->sc', p, P, p)
    c_term = jnp.einsum('cf,sf->sc', q, p) + 0.5 * tPt - b_quad[None, :]
    d4 = tPr_qr ** 2 - rPr * 2.0 * c_term
    a_quad = (-tPr_qr + jnp.sqrt(d4)) / rPr
    a_lin = -c_term / tPr_qr
    mu = jnp.where(jnp.abs(rPr) <= EPS, a_lin, a_quad)
    mu = jnp.where(mu >= 0.0, mu, jnp.inf)
    max_quad = jnp.min(mu, axis=1)

    max_len = jnp.minimum(max_lin, max_quad)
    ls = betas * max_len
    return p + ls[:, None] * r


if __name__ == "__main__":
    F, CL, CQ = 16, 8, 3      # features, linear / quadratic constraints

    key = jax.random.PRNGKey(0)
    k_z, k_A, k_pt, k_bl, k_M, k_q, k_bq, k_z2 = jax.random.split(key, 8)

    # Deterministic parameters (shapes per __init__): a strictly feasible
    # interior point of an LQ region so max ray lengths are finite & positive.
    A = jax.random.normal(k_A, (CL, F), dtype=jnp.float32)
    point = 0.05 * jax.random.normal(k_pt, (F,), dtype=jnp.float32)
    b_lin = A @ point + 1.0 + jax.random.uniform(k_bl, (CL,), dtype=jnp.float32)

    M = jax.random.normal(k_M, (CQ, F, F), dtype=jnp.float32)
    P = jnp.einsum('cfg,chg->cfh', M, M) / F + jnp.eye(F)[None, :, :]   # SPD
    q = 0.1 * jax.random.normal(k_q, (CQ, F), dtype=jnp.float32)
    b_quad = (0.5 * jnp.einsum('f,cfg,g->c', point, P, point)
              + q @ point + 1.0
              + jax.random.uniform(k_bq, (CQ,), dtype=jnp.float32))

    # One-time constant preprocessing, cached and reused across forward calls.
    params = prepare_lq_ray_shift_params(A, b_lin, P, q, b_quad, point)

    # --- small single-tile case: S=64 -> one padded 128-lane tile ---
    S1 = 64
    zs1 = jax.random.normal(k_z, (S1, F + 1), dtype=jnp.float32)
    xs1 = jax.block_until_ready(lq_ray_shift_forward(zs1, params))
    ref1 = _reference_forward(zs1, point, A, b_lin, P, q, b_quad)
    assert xs1.shape == (S1, F)
    assert bool(jnp.all(jnp.isfinite(xs1)))
    assert jnp.allclose(xs1, ref1, rtol=1e-3, atol=1e-3), (
        f"max abs err {jnp.max(jnp.abs(xs1 - ref1))}")

    # --- multi-tile case: S=1000 -> tile 512, padded to 1024, grid=(2,) ---
    S2 = 1000
    zs2 = jax.random.normal(k_z2, (S2, F + 1), dtype=jnp.float32)
    xs2 = jax.block_until_ready(lq_ray_shift_forward(zs2, params))
    ref2 = _reference_forward(zs2, point, A, b_lin, P, q, b_quad)
    assert xs2.shape == (S2, F)
    assert bool(jnp.all(jnp.isfinite(xs2)))
    assert jnp.allclose(xs2, ref2, rtol=1e-3, atol=1e-3), (
        f"max abs err {jnp.max(jnp.abs(xs2 - ref2))}")

    # --- optional bf16-streaming path (HBM-traffic halving); compare against
    # the reference evaluated on identically bf16-rounded inputs. ---
    xs_bf = jax.block_until_ready(
        lq_ray_shift_forward(zs1, params, io_dtype=jnp.bfloat16))
    zs1_q = zs1.astype(jnp.bfloat16).astype(jnp.float32)
    ref_bf = _reference_forward(zs1_q, point, A, b_lin, P, q, b_quad)
    assert bool(jnp.all(jnp.isfinite(xs_bf)))
    assert jnp.allclose(xs_bf, ref_bf, rtol=1e-2, atol=1e-2), (
        f"max abs err {jnp.max(jnp.abs(xs_bf - ref_bf))}")

    print("KERNEL_OK")
</pallas_src>

<mosaic_0001>
module attributes {stable_mosaic.version = 11 : i64} {
  func.func @_lq_ray_shift_kernel(%arg0: i32, %arg1: memref<17x128xf32, #tpu.memory_space<vmem>>, %arg2: memref<16x1xf32, #tpu.memory_space<vmem>>, %arg3: memref<72x16xf32, #tpu.memory_space<vmem>>, %arg4: memref<8x1xf32, #tpu.memory_space<vmem>>, %arg5: memref<3x1xf32, #tpu.memory_space<vmem>>, %arg6: memref<8x48xf32, #tpu.memory_space<vmem>>, %arg7: memref<16x128xf32, #tpu.memory_space<vmem>>) attributes {dimension_semantics = [#tpu.dimension_semantics<parallel>], iteration_bounds = array<i64: 1>, scalar_prefetch = 0 : i64, scratch_operands = 0 : i64, tpu.core_type = #tpu.core_type<tc>, window_params = [{transform_indices = @transform_0, window_bounds = array<i64: 17, 128>}, {pipeline_mode = #tpu.pipeline_mode<synchronous>, transform_indices = @transform_1, window_bounds = array<i64: 16, 1>}, {pipeline_mode = #tpu.pipeline_mode<synchronous>, transform_indices = @transform_2, window_bounds = array<i64: 72, 16>}, {pipeline_mode = #tpu.pipeline_mode<synchronous>, transform_indices = @transform_3, window_bounds = array<i64: 8, 1>}, {pipeline_mode = #tpu.pipeline_mode<synchronous>, transform_indices = @transform_4, window_bounds = array<i64: 3, 1>}, {pipeline_mode = #tpu.pipeline_mode<synchronous>, transform_indices = @transform_5, window_bounds = array<i64: 8, 48>}, {transform_indices = @transform_6, window_bounds = array<i64: 16, 128>}]} {
    %c0 = arith.constant 0 : index
    %c0_0 = arith.constant 0 : index
    %0 = vector.load %arg1[%c0, %c0_0] : memref<17x128xf32, #tpu.memory_space<vmem>>, vector<17x128xf32>
    %1 = vector.extract_strided_slice %0 {offsets = [0, 0], sizes = [16, 128], strides = [1, 1]} : vector<17x128xf32> to vector<16x128xf32>
    %2 = arith.mulf %1, %1 : vector<16x128xf32>
    %cst = arith.constant dense<0.000000e+00> : vector<128xf32>
    %3 = vector.multi_reduction <add>, %2, %cst [0] : vector<16x128xf32> to vector<128xf32>
    %4 = vector.shape_cast %3 : vector<128xf32> to vector<1x128xf32>
    %cst_1 = arith.constant 1.000000e-24 : f32
    %5 = vector.broadcast %cst_1 : f32 to vector<1x128xf32>
    %6 = arith.maximumf %4, %5 : vector<1x128xf32>
    %7 = math.rsqrt %6 : vector<1x128xf32>
    %8 = vector.broadcast %7 : vector<1x128xf32> to vector<16x128xf32>
    %9 = arith.mulf %1, %8 : vector<16x128xf32>
    %10 = vector.extract_strided_slice %0 {offsets = [16, 0], sizes = [1, 128], strides = [1, 1]} : vector<17x128xf32> to vector<1x128xf32>
    %11 = arith.negf %10 : vector<1x128xf32>
    %12 = math.exp %11 : vector<1x128xf32>
    %cst_2 = arith.constant 1.000000e+00 : f32
    %13 = vector.broadcast %cst_2 : f32 to vector<1x128xf32>
    %14 = arith.addf %13, %12 : vector<1x128xf32>
    %15 = arith.divf %13, %14 : vector<1x128xf32>
    %c0_3 = arith.constant 0 : index
    %c0_4 = arith.constant 0 : index
    %16 = vector.load %arg3[%c0_3, %c0_4] : memref<72x16xf32, #tpu.memory_space<vmem>>, vector<72x16xf32>
    %cst_5 = arith.constant dense<0.000000e+00> : vector<72x128xf32>
    %17 = tpu.matmul %16, %9, %cst_5 {dimension_numbers = #tpu.dot_dimension_numbers<[1], [0], [0], [1], [0, 0, 1, 1], [], []>} : vector<72x16xf32>, vector<16x128xf32>, vector<72x128xf32> -> vector<72x128xf32>
    %18 = vector.extract_strided_slice %17 {offsets = [0, 0], sizes = [8, 128], strides = [1, 1]} : vector<72x128xf32> to vector<8x128xf32>
    %19 = vector.extract_strided_slice %17 {offsets = [8, 0], sizes = [3, 128], strides = [1, 1]} : vector<72x128xf32> to vector<3x128xf32>
    %20 = vector.extract_strided_slice %17 {offsets = [16, 0], sizes = [3, 128], strides = [1, 1]} : vector<72x128xf32> to vector<3x128xf32>
    %21 = vector.extract_strided_slice %17 {offsets = [24, 0], sizes = [48, 128], strides = [1, 1]} : vector<72x128xf32> to vector<48x128xf32>
    %c0_6 = arith.constant 0 : index
    %c0_7 = arith.constant 0 : index
    %22 = vector.load %arg4[%c0_6, %c0_7] : memref<8x1xf32, #tpu.memory_space<vmem>>, vector<8x1xf32>
    %23 = vector.broadcast %22 : vector<8x1xf32> to vector<8x128xf32>
    %24 = arith.divf %23, %18 : vector<8x128xf32>
    %cst_8 = arith.constant 0.000000e+00 : f32
    %25 = vector.broadcast %cst_8 : f32 to vector<8x128xf32>
    %26 = arith.cmpf oge, %18, %25 : vector<8x128xf32>
    %cst_9 = arith.constant 0x7F800000 : f32
    %27 = vector.broadcast %cst_9 : f32 to vector<8x128xf32>
    %28 = arith.select %26, %24, %27 : vector<8x128xi1>, vector<8x128xf32>
    %cst_10 = arith.constant dense<0x7F800000> : vector<128xf32>
    %29 = vector.multi_reduction <minimumf>, %28, %cst_10 [0] : vector<8x128xf32> to vector<128xf32>
    %30 = vector.shape_cast %29 : vector<128xf32> to vector<1x128xf32>
    %31 = tpu.concatenate %9, %9, %9 in 0 : vector<16x128xf32>, vector<16x128xf32>, vector<16x128xf32> -> vector<48x128xf32>
    %c0_11 = arith.constant 0 : index
    %c0_12 = arith.constant 0 : index
    %32 = vector.load %arg6[%c0_11, %c0_12] : memref<8x48xf32, #tpu.memory_space<vmem>>, vector<8x48xf32>
    %33 = arith.mulf %31, %21 : vector<48x128xf32>
    %cst_13 = arith.constant dense<0.000000e+00> : vector<8x128xf32>
    %34 = tpu.matmul %32, %33, %cst_13 {dimension_numbers = #tpu.dot_dimension_numbers<[1], [0], [0], [1], [0, 0, 1, 1], [], []>} : vector<8x48xf32>, vector<48x128xf32>, vector<8x128xf32> -> vector<8x128xf32>
    %35 = vector.extract_strided_slice %34 {offsets = [0, 0], sizes = [3, 128], strides = [1, 1]} : vector<8x128xf32> to vector<3x128xf32>
    %c0_14 = arith.constant 0 : index
    %c0_15 = arith.constant 0 : index
    %36 = vector.load %arg5[%c0_14, %c0_15] : memref<3x1xf32, #tpu.memory_space<vmem>>, vector<3x1xf32>
    %37 = arith.addf %20, %19 : vector<3x128xf32>
    %38 = arith.mulf %37, %37 : vector<3x128xf32>
    %cst_16 = arith.constant 2.000000e+00 : f32
    %39 = vector.broadcast %cst_16 : f32 to vector<3x1xf32>
    %40 = arith.mulf %39, %36 : vector<3x1xf32>
    %41 = vector.broadcast %40 : vector<3x1xf32> to vector<3x128xf32>
    %42 = arith.mulf %35, %41 : vector<3x128xf32>
    %43 = arith.subf %38, %42 : vector<3x128xf32>
    %cst_17 = arith.constant 0.000000e+00 : f32
    %44 = vector.broadcast %cst_17 : f32 to vector<3x128xf32>
    %45 = arith.subf %44, %37 : vector<3x128xf32>
    %46 = math.sqrt %43 : vector<3x128xf32>
    %47 = arith.addf %45, %46 : vector<3x128xf32>
    %48 = arith.divf %47, %35 : vector<3x128xf32>
    %cst_18 = arith.constant 0.000000e+00 : f32
    %49 = vector.broadcast %cst_18 : f32 to vector<3x1xf32>
    %50 = arith.subf %49, %36 : vector<3x1xf32>
    %51 = vector.broadcast %50 : vector<3x1xf32> to vector<3x128xf32>
    %52 = arith.divf %51, %37 : vector<3x128xf32>
    %53 = math.absf %35 : vector<3x128xf32>
    %cst_19 = arith.constant 9.99999996E-13 : f32
    %54 = vector.broadcast %cst_19 : f32 to vector<3x128xf32>
    %55 = arith.cmpf ole, %53, %54 : vector<3x128xf32>
    %56 = arith.select %55, %52, %48 : vector<3x128xi1>, vector<3x128xf32>
    %cst_20 = arith.constant 0.000000e+00 : f32
    %57 = vector.broadcast %cst_20 : f32 to vector<3x128xf32>
    %58 = arith.cmpf oge, %56, %57 : vector<3x128xf32>
    %cst_21 = arith.constant 0x7F800000 : f32
    %59 = vector.broadcast %cst_21 : f32 to vector<3x128xf32>
    %60 = arith.select %58, %56, %59 : vector<3x128xi1>, vector<3x128xf32>
    %cst_22 = arith.constant dense<0x7F800000> : vector<128xf32>
    %61 = vector.multi_reduction <minimumf>, %60, %cst_22 [0] : vector<3x128xf32> to vector<128xf32>
    %62 = vector.shape_cast %61 : vector<128xf32> to vector<1x128xf32>
    %63 = arith.minimumf %30, %62 : vector<1x128xf32>
    %64 = arith.mulf %15, %63 : vector<1x128xf32>
    %c0_23 = arith.constant 0 : index
    %c0_24 = arith.constant 0 : index
    %65 = vector.load %arg2[%c0_23, %c0_24] : memref<16x1xf32, #tpu.memory_space<vmem>>, vector<16x1xf32>
    %66 = vector.broadcast %64 : vector<1x128xf32> to vector<16x128xf32>
    %67 = arith.mulf %66, %9 : vector<16x128xf32>
    %68 = vector.broadcast %65 : vector<16x1xf32> to vector<16x128xf32>
    %69 = arith.addf %68, %67 : vector<16x128xf32>
    %c0_25 = arith.constant 0 : index
    %c0_26 = arith.constant 0 : index
    %70 = vector.load %arg7[%c0_25, %c0_26] : memref<16x128xf32, #tpu.memory_space<vmem>>, vector<16x128xf32>
    tpu.vector_store %arg7[%c0_25, %c0_26], %69 {strides = array<i32>} : memref<16x128xf32, #tpu.memory_space<vmem>>, vector<16x128xf32>,
    return
  }
  func.func @transform_0(%arg0: i32) -> (i32, i32) {
    %c0_i32 = arith.constant 0 : i32
    %c0_i32_0 = arith.constant 0 : i32
    return %c0_i32, %arg0 : i32, i32
  }
  func.func @transform_1(%arg0: i32) -> (i32, i32) {
    %c0_i32 = arith.constant 0 : i32
    %c0_i32_0 = arith.constant 0 : i32
    %c0_i32_1 = arith.constant 0 : i32
    return %c0_i32, %c0_i32_0 : i32, i32
  }
  func.func @transform_2(%arg0: i32) -> (i32, i32) {
    %c0_i32 = arith.constant 0 : i32
    %c0_i32_0 = arith.constant 0 : i32
    %c0_i32_1 = arith.constant 0 : i32
    return %c0_i32, %c0_i32_0 : i32, i32
  }
  func.func @transform_3(%arg0: i32) -> (i32, i32) {
    %c0_i32 = arith.constant 0 : i32
    %c0_i32_0 = arith.constant 0 : i32
    %c0_i32_1 = arith.constant 0 : i32
    return %c0_i32, %c0_i32_0 : i32, i32
  }
  func.func @transform_4(%arg0: i32) -> (i32, i32) {
    %c0_i32 = arith.constant 0 : i32
    %c0_i32_0 = arith.constant 0 : i32
    %c0_i32_1 = arith.constant 0 : i32
    return %c0_i32, %c0_i32_0 : i32, i32
  }
  func.func @transform_5(%arg0: i32) -> (i32, i32) {
    %c0_i32 = arith.constant 0 : i32
    %c0_i32_0 = arith.constant 0 : i32
    %c0_i32_1 = arith.constant 0 : i32
    return %c0_i32, %c0_i32_0 : i32, i32
  }
  func.func @transform_6(%arg0: i32) -> (i32, i32) {
    %c0_i32 = arith.constant 0 : i32
    %c0_i32_0 = arith.constant 0 : i32
    return %c0_i32, %arg0 : i32, i32
  }
}

</mosaic_0001>

<llo_original>
// kernel: tpu_custom_call.1
$region0: #{tpu_custom_call.1}
  #allocation0 [shape = 'u32[]', space=smem, size = 0x4, offset = 0x4, fixed_abs, tag = 'smem constant byte address 0x4 - core index']
  #allocation1 [shape = 'u32[72,128]{1,0:T(1,128)}', space=vmem, size = 0x9000, scoped, tag = 'internal scratch']
  %s0 = inlined_call_operand.vmem [shape: f32[17,128], index: 0, kind: input, shape index: {}]
  %s1 = inlined_call_operand.vmem [shape: f32[16,1], index: 1, kind: input, shape index: {}]
  %s2 = inlined_call_operand.vmem [shape: f32[72,16], index: 2, kind: input, shape index: {}]
  %s3 = inlined_call_operand.vmem [shape: f32[8,1], index: 3, kind: input, shape index: {}]
  %s4 = inlined_call_operand.vmem [shape: f32[3,1], index: 4, kind: input, shape index: {}]
  %s5 = inlined_call_operand.vmem [shape: f32[8,48], index: 5, kind: input, shape index: {}]
  %s6 = inlined_call_operand.hbm [shape: f32[16,128], index: 6, kind: output, shape index: {}]
  %s7 = sld [smem:[#allocation0]]
  $region34: #{tpu_custom_call.1} parent=0
    _
  %s9 = ssub.s32 1, %s7
  %s10 = scalar_select 0, %s9, %s7
  $region1: #{tpu_custom_call.1} parent=0
    #allocation2 [shape = 'u8[8192]{0}', space=vmem, size = 0x2000, scoped, tag = 'output window, operand 0, single buffered']
    #allocation3 [shape = 's32[1]{0}', space=sflag, size = 0x4, scoped, tag = 'scoped memory for tpu_custom_call.1']
    %11 = vsyncpa [#allocation3], 0
    // Predicated region
    $region2: #{tpu_custom_call.1} parent=1 // pred_check
      _
    $region3: #{tpu_custom_call.1} parent=1 // pred_check_branch
      %13 = sbr.rel (0) target = $region5
    $region4: #{tpu_custom_call.1} parent=1 // pred_region
      _
    $region5: #{tpu_custom_call.1} parent=1 // pred_fallthru
      _
    // Predicated region
    $region6: #{tpu_custom_call.1} parent=1 // pred_check
      _
    $region7: #{tpu_custom_call.1} parent=1 // pred_check_branch
      %15 = sbr.rel (0) target = $region9
    $region8: #{tpu_custom_call.1} parent=1 // pred_region
      _
    $region9: #{tpu_custom_call.1} parent=1 // pred_fallthru
      _
    // Predicated region
    $region10: #{tpu_custom_call.1} parent=1 // pred_check
      _
    $region11: #{tpu_custom_call.1} parent=1 // pred_check_branch
      %17 = sbr.rel (0) target = $region13
    $region12: #{tpu_custom_call.1} parent=1 // pred_region
      _
    $region13: #{tpu_custom_call.1} parent=1 // pred_fallthru
      _
    // Predicated region
    $region14: #{tpu_custom_call.1} parent=1 // pred_check
      _
    $region15: #{tpu_custom_call.1} parent=1 // pred_check_branch
      %19 = sbr.rel (0) target = $region17
    $region16: #{tpu_custom_call.1} parent=1 // pred_region
      _
    $region17: #{tpu_custom_call.1} parent=1 // pred_fallthru
      _
    // Predicated region
    $region18: #{tpu_custom_call.1} parent=1 // pred_check
      _
    $region19: #{tpu_custom_call.1} parent=1 // pred_check_branch
      %21 = sbr.rel (0) target = $region21
    $region20: #{tpu_custom_call.1} parent=1 // pred_region
      _
    $region21: #{tpu_custom_call.1} parent=1 // pred_fallthru
      _
    // Predicated region
    $region22: #{tpu_custom_call.1} parent=1 // pred_check
      _
    $region23: #{tpu_custom_call.1} parent=1 // pred_check_branch
      %23 = sbr.rel (0) target = $region25
    $region24: #{tpu_custom_call.1} parent=1 // pred_region
      _
    $region25: #{tpu_custom_call.1} parent=1 // pred_fallthru
      _
    %v24 = vld [vmem:[%s0] sm:$0xff]
    %v25 = vld [vmem:[%s0 + $0x8] sm:$0xff]
    %v26 = vld [vmem:[%s0 + $0x10] sm:$0x1]
    %v27 = vmul.f32 %v24, %v24
    %v28 = vmul.f32 %v25, %v25
    %v29 = vadd.f32 %v27, %v28
    %v30 = vrot.slane %v29, 4
    %v31 = vadd.f32 %v29, %v30
    %v32 = vrot.slane %v31, 2
    %v33 = vadd.f32 %v31, %v32
    %v34 = vrot.slane %v33, 1
    %v35 = vadd.f32 %v33, %v34
    %v36 = vmax.f32 %v35, 1e-24
    %v37 = vrsqrt.pop %v36
    %v38 = vmul.f32 %v37, %v36
    %v39 = vmul.f32 %v38, %v37
    %v40 = vmul.f32 0.5, %v39
    %v41 = vsub.f32 1.5, %v40
    %v42 = vmul.f32 %v37, %v41
    %vm43 = vweird.f32 %v36
    %vm44 = vweird.f32 %v37
    %vm45 = vmor %vm43, %vm44
    %v46 = vsel %vm45, %v37, %v42
    %v47 = vmul.f32 %v24, %v46
    %v48 = vmul.f32 %v25, %v46
    %v49 = vxor.u32 %v26, 2147483648
    %v50 = vmul.f32 %v49, 1.442695
    %v51 = vpow.pop %v50
    %v52 = vadd.f32 %v51, 1.0
    %v53 = vrcp.pop %v52
    %v54 = vmul.f32 %v52, %v53
    %v55 = vsub.f32 1.0, %v54
    %v56 = vmul.f32 %v53, %v55
    %v57 = vadd.f32 %v53, %v56
    %vm58 = vweird.f32 %v52
    %vm59 = vweird.f32 %v53
    %vm60 = vmor %vm58, %vm59
    %v61 = vsel %vm60, %v53, %v57
    %v62 = vand.u32 2147483647, %v52
    %vm63 = vcmp.eq.f32.partialorder %v62, 8.507059e+37
    %v64 = vand.u32 %v52, 2147483648
    %v65 = vor.u32 1.1754944e-38, %v64
    %v66 = vsel %vm63, %v65, %v61
    %v67 = vmul.f32 1.0, %v66
    %v68 = vld [vmem:[%s2] sm:$0xff]
    %v69 = vld [vmem:[%s2 + $0x8] sm:$0xff]
    %v70 = vld [vmem:[%s2 + $0x10] sm:$0xff]
    %v71 = vld [vmem:[%s2 + $0x18] sm:$0xff]
    %v72 = vld [vmem:[%s2 + $0x20] sm:$0xff]
    %v73 = vld [vmem:[%s2 + $0x28] sm:$0xff]
    %v74 = vld [vmem:[%s2 + $0x30] sm:$0xff]
    %v75 = vld [vmem:[%s2 + $0x38] sm:$0xff]
    %v76 = vld [vmem:[%s2 + $0x40] sm:$0xff]
    %vm77 = vcmask 130048
    %v79 = vsel %vm77, %v68, 0
    %v82 = vsel %vm77, %v69, 0
    %v85 = vsel %vm77, %v70, 0
    %v88 = vsel %vm77, %v71, 0
    %v91 = vsel %vm77, %v72, 0
    %v94 = vsel %vm77, %v73, 0
    %v97 = vsel %vm77, %v74, 0
    %v100 = vsel %vm77, %v75, 0
    %v103 = vsel %vm77, %v76, 0
    %105 = vmatpush.msra.mxu0 0.0
    %106 = vmatpush.msra.mxu0 0.0
    %107 = vmatpush.msra.mxu0 0.0
    %108 = vmatpush.msra.mxu0 0.0
    %109 = vmatpush.msra.mxu0 0.0
    %110 = vmatpush.msra.mxu0 0.0
    %111 = vmatpush.msra.mxu0 0.0
    %112 = vmatpush.msra.mxu0 0.0
    %113 = vmatpush.msra.mxu0 0.0
    %114 = vmatpush.msra.mxu0 0.0
    %115 = vmatpush.msra.mxu0 0.0
    %116 = vmatpush.msra.mxu0 0.0
    %117 = vmatpush.msra.mxu0 0.0
    %118 = vmatpush.msra.mxu0 0.0
    %119 = vmatpush.msra.mxu0 %v48
    %120 = vmatpush.msra.mxu0 %v47
    %121 = vmatmul.f32.gmra.mxu0 %v79
    %v122 = vpop.f32.mrf.mxu0
    %v123 = vadd.f32 0.0, %v122
    %124 = vmatmul.f32.gmra.mxu0 %v82
    %v125 = vpop.f32.mrf.mxu0
    %v126 = vadd.f32 0.0, %v125
    %127 = vmatmul.f32.gmra.mxu0 %v85
    %v128 = vpop.f32.mrf.mxu0
    %v129 = vadd.f32 0.0, %v128
    %130 = vmatmul.f32.gmra.mxu0 %v88
    %v131 = vpop.f32.mrf.mxu0
    %v132 = vadd.f32 0.0, %v131
    %133 = vmatmul.f32.gmra.mxu0 %v91
    %v134 = vpop.f32.mrf.mxu0
    %v135 = vadd.f32 0.0, %v134
    %136 = vmatmul.f32.gmra.mxu0 %v94
    %v137 = vpop.f32.mrf.mxu0
    %v138 = vadd.f32 0.0, %v137
    %139 = vmatmul.f32.gmra.mxu0 %v97
    %v140 = vpop.f32.mrf.mxu0
    %v141 = vadd.f32 0.0, %v140
    %142 = vmatmul.f32.gmra.mxu0 %v100
    %v143 = vpop.f32.mrf.mxu0
    %v144 = vadd.f32 0.0, %v143
    %145 = vmatmul.f32.gmra.mxu0 %v103
    %v146 = vpop.f32.mrf.mxu0
    %v147 = vadd.f32 0.0, %v146
    %148 = vdwg.mxu0
    %v149 = vld [vmem:[%s3] sm:$0xff]
    %151 = vset.pattern.permute.xlu0 0
    %152 = vperm.xlu0 %151, %v149
    %v153 = vpop.permute.xlu0 %152
    %v155 = vrcp.pop %v123
    %v156 = vmul.f32 %v123, %v155
    %v157 = vsub.f32 1.0, %v156
    %v158 = vmul.f32 %v155, %v157
    %v159 = vadd.f32 %v155, %v158
    %vm160 = vweird.f32 %v123
    %vm161 = vweird.f32 %v155
    %vm162 = vmor %vm160, %vm161
    %v163 = vsel %vm162, %v155, %v159
    %v164 = vand.u32 2147483647, %v123
    %vm165 = vcmp.eq.f32.partialorder %v164, 8.507059e+37
    %v166 = vand.u32 %v123, 2147483648
    %v167 = vor.u32 1.1754944e-38, %v166
    %v168 = vsel %vm165, %v167, %v163
    %v169 = vmul.f32 %v153, %v168
    %vm170 = vcmp.ge.f32.partialorder %v123, 0.0
    %v171 = vsel %vm170, %v169, inf
    %v172 = vrot.slane %v171, 4
    %v173 = vmin.f32 %v171, %v172
    %v174 = vrot.slane %v173, 2
    %v175 = vmin.f32 %v173, %v174
    %v176 = vrot.slane %v175, 1
    %v177 = vmin.f32 %v175, %v176
    %v178 = vld [vmem:[%s5] sm:$0xff]
    %v179 = vmul.f32 %v47, %v132
    %v180 = vmul.f32 %v48, %v135
    %v181 = vmul.f32 %v47, %v138
    %v182 = vmul.f32 %v48, %v141
    %v183 = vmul.f32 %v47, %v144
    %v184 = vmul.f32 %v48, %v147
    %vm185 = vcmask 392192
    %v187 = vsel %vm185, %v178, 0
    %189 = vmatpush.msra.mxu0 0.0
    %190 = vmatpush.msra.mxu0 0.0
    %191 = vmatpush.msra.mxu0 0.0
    %192 = vmatpush.msra.mxu0 0.0
    %193 = vmatpush.msra.mxu0 0.0
    %194 = vmatpush.msra.mxu0 0.0
    %195 = vmatpush.msra.mxu0 0.0
    %196 = vmatpush.msra.mxu0 0.0
    %197 = vmatpush.msra.mxu0 0.0
    %198 = vmatpush.msra.mxu0 0.0
    %199 = vmatpush.msra.mxu0 %v184
    %200 = vmatpush.msra.mxu0 %v183
    %201 = vmatpush.msra.mxu0 %v182
    %202 = vmatpush.msra.mxu0 %v181
    %203 = vmatpush.msra.mxu0 %v180
    %204 = vmatpush.msra.mxu0 %v179
    %205 = vmatmul.f32.gmra.mxu0 %v187
    %v206 = vpop.f32.mrf.mxu0
    %v207 = vadd.f32 0.0, %v206
    %208 = vdwg.mxu0
    %v209 = vld [vmem:[%s4] sm:$0x7]
    %v210 = vadd.f32 %v129, %v126
    %v211 = vmul.f32 %v210, %v210
    %v212 = vmul.f32 %v209, 2.0
    %214 = vset.pattern.permute.xlu0 0
    %215 = vperm.xlu0 %214, %v212
    %v216 = vpop.permute.xlu0 %215
    %v218 = vmul.f32 %v207, %v216
    %v219 = vsub.f32 %v211, %v218
    %v220 = vsub.f32 0.0, %v210
    %v221 = vrsqrt.pop %v219
    %v222 = vmul.f32 %v221, %v219
    %v223 = vmul.f32 %v222, %v221
    %v224 = vmul.f32 0.5, %v223
    %v225 = vsub.f32 1.5, %v224
    %v226 = vmul.f32 %v221, %v225
    %v227 = vmul.f32 %v219, %v226
    %vm228 = vcmp.eq.f32.partialorder %v219, inf
    %v229 = vsel %vm228, %v219, %v227
    %vm230 = vcmp.eq.f32.partialorder %v219, 0.0
    %v231 = vand.u32 %v219, 2147483648
    %v232 = vsel %vm230, %v231, %v229
    %v233 = vadd.f32 %v220, %v232
    %v234 = vrcp.pop %v207
    %v235 = vmul.f32 %v207, %v234
    %v236 = vsub.f32 1.0, %v235
    %v237 = vmul.f32 %v234, %v236
    %v238 = vadd.f32 %v234, %v237
    %vm239 = vweird.f32 %v207
    %vm240 = vweird.f32 %v234
    %vm241 = vmor %vm239, %vm240
    %v242 = vsel %vm241, %v234, %v238
    %v243 = vand.u32 2147483647, %v207
    %vm244 = vcmp.eq.f32.partialorder %v243, 8.507059e+37
    %v245 = vand.u32 %v207, 2147483648
    %v246 = vor.u32 1.1754944e-38, %v245
    %v247 = vsel %vm244, %v246, %v242
    %v248 = vmul.f32 %v233, %v247
    %v249 = vsub.f32 0.0, %v209
    %251 = vset.pattern.permute.xlu0 0
    %252 = vperm.xlu0 %251, %v249
    %v253 = vpop.permute.xlu0 %252
    %v255 = vrcp.pop %v210
    %v256 = vmul.f32 %v210, %v255
    %v257 = vsub.f32 1.0, %v256
    %v258 = vmul.f32 %v255, %v257
    %v259 = vadd.f32 %v255, %v258
    %vm260 = vweird.f32 %v210
    %vm261 = vweird.f32 %v255
    %vm262 = vmor %vm260, %vm261
    %v263 = vsel %vm262, %v255, %v259
    %v264 = vand.u32 2147483647, %v210
    %vm265 = vcmp.eq.f32.partialorder %v264, 8.507059e+37
    %v266 = vand.u32 %v210, 2147483648
    %v267 = vor.u32 1.1754944e-38, %v266
    %v268 = vsel %vm265, %v267, %v263
    %v269 = vmul.f32 %v253, %v268
    %v270 = vand.u32 2147483647, %v207
    %vm271 = vcmp.le.f32.partialorder %v270, 1e-12
    %v272 = vsel %vm271, %v269, %v248
    %vm273 = vcmp.ge.f32.partialorder %v272, 0.0
    %v274 = vsel %vm273, %v272, inf
    %vm275 = vcmask 1042432
    %v276 = vsel %vm275, %v274, inf
    %v277 = vrot.slane %v276, 4
    %v278 = vmin.f32 %v276, %v277
    %v279 = vrot.slane %v278, 2
    %v280 = vmin.f32 %v278, %v279
    %v281 = vrot.slane %v280, 1
    %v282 = vmin.f32 %v280, %v281
    %v283 = vmin.f32 %v177, %v282
    %v284 = vmul.f32 %v67, %v283
    %v285 = vld [vmem:[%s1] sm:$0xff]
    %v286 = vld [vmem:[%s1 + $0x8] sm:$0xff]
    %v287 = vperm.slane %v284, 0
    %v288 = vmul.f32 %v287, %v47
    %v289 = vmul.f32 %v287, %v48
    %291 = vset.pattern.permute.xlu0 0
    %292 = vperm.xlu0 %291, %v285
    %v293 = vpop.permute.xlu0 %292
    %296 = vset.pattern.permute.xlu0 0
    %297 = vperm.xlu0 %296, %v286
    %v298 = vpop.permute.xlu0 %297
    %v300 = vadd.f32 %v293, %v288
    %v301 = vadd.f32 %v298, %v289
    %302 = vst [vmem:[#allocation2] sm:$0xff] %v300
    %303 = vst [vmem:[#allocation2 + $0x8] sm:$0xff] %v301
    // Predicated region
    $region26: #{tpu_custom_call.1} parent=1 // pred_check
      _
    $region27: #{tpu_custom_call.1} parent=1 // pred_check_branch
      %305 = sbr.rel (0) target = $region29
    $region28: #{tpu_custom_call.1} parent=1 // pred_region
      %307 = vsyncadd [#allocation3], 0
      %s308 = sshll.u32 [#allocation2], 4
      %s309 = int_to_ptr.vmem [resolvable:$true] %s308
      %s310 = sshll.u32 %s6, 4
      %s311 = int_to_ptr.hbm [resolvable:$true] %s310
      %316 = dma.vmem_to_hbm [thread:$0]  %s309, 256, %s311, [#allocation3], 128, 128, 8
    $region29: #{tpu_custom_call.1} parent=1 // pred_fallthru
      _
    // Predicated region
    $region30: #{tpu_custom_call.1} parent=1 // pred_check
      _
    $region31: #{tpu_custom_call.1} parent=1 // pred_check_branch
      %318 = sbr.rel (0) target = $region33
    $region32: #{tpu_custom_call.1} parent=1 // pred_region
      %320 = dma.done [#allocation3], 256
    $region33: #{tpu_custom_call.1} parent=1 // pred_fallthru
      _
    %321 = vsyncpa [#allocation3], 1

</llo_original>
